<compile_context>
chip_gen: v5e
topology: v5e:2x2
jax: 0.10.0
libtpu: 0.0.40
codegen_flags: <defaults>
</compile_context>

<pallas_src>
import jax
import jax.numpy as jnp
from jax.experimental import pallas as pl
from jax.experimental.pallas import tpu as pltpu


# ----------------------------------------------------------------------------
# Pass 1: projection  h = x @ W + b,  s = sum(h * a_self),  t = sum(h * a_neighs)
# ----------------------------------------------------------------------------
def _proj_kernel(x_ref, w_ref, b_ref, a_s_ref, a_n_ref, h_ref, s_ref, t_ref):
    h = jnp.dot(x_ref[...], w_ref[...],
                preferred_element_type=jnp.float32) + b_ref[...]      # (TM, Fpad)
    h_ref[...] = h
    s_ref[...] = jnp.sum(h * a_s_ref[...], axis=-1, keepdims=True)    # (TM, 1)
    t_ref[...] = jnp.sum(h * a_n_ref[...], axis=-1, keepdims=True)    # (TM, 1)


# ----------------------------------------------------------------------------
# Pass 2: masked cosine attention + aggregation, key-tiled with VMEM accumulators
# ----------------------------------------------------------------------------
def _make_attn_kernel(apply_elu):
    def _attn_kernel(s_ref, t_ref, adj_ref, h_ref, beta_ref, out_ref,
                     denom_sc, acc_sc):
        k = pl.program_id(1)

        @pl.when(k == 0)
        def _():
            denom_sc[...] = jnp.zeros_like(denom_sc)
            acc_sc[...] = jnp.zeros_like(acc_sc)

        s = s_ref[...]                                   # (TM, 1)  f32
        t = t_ref[...]                                   # (1,  TK) f32
        beta = beta_ref[0]

        # cos = (s t^T) / (|s| |t|^T + 1e-7)   (exact torch epsilon placement)
        num = s * t                                      # (TM, TK)
        den = jnp.abs(s) * jnp.abs(t) + jnp.float32(1e-7)
        cos = num / den

        # LeakyReLU(0.2) * beta; cos in [-1,1], beta init in [0,1] so the
        # logits are bounded -> shift-free softmax (no row-max pass needed).
        alpha = jnp.float32(0.2)
        logits = beta * jnp.where(cos >= 0.0, cos, alpha * cos)

        # Masked-out edges contribute exactly 0 to both numerator and denom.
        e = jnp.where(adj_ref[...] > 0, jnp.exp(logits), 0.0)   # (TM, TK) f32

        denom_sc[...] += jnp.sum(e, axis=-1, keepdims=True)     # (TM, 1)
        acc_sc[...] += jnp.dot(e, h_ref[...],
                               preferred_element_type=jnp.float32)  # (TM, Fpad)

        @pl.when(k == pl.num_programs(1) - 1)
        def _():
            denom = jnp.maximum(denom_sc[...], jnp.float32(1e-30))
            h_prime = acc_sc[...] * (1.0 / denom)
            if apply_elu:
                out_ref[...] = jnp.where(
                    h_prime > 0.0, h_prime,
                    jnp.exp(jnp.minimum(h_prime, 0.0)) - 1.0)
            else:
                out_ref[...] = h_prime

    return _attn_kernel


# ----------------------------------------------------------------------------
# Wrapper helpers
# ----------------------------------------------------------------------------
def _round_up(v, m):
    return ((v + m - 1) // m) * m


def _pick_tile(npad, desired):
    """Largest tile <= desired that divides npad (npad is a multiple of 128)."""
    t = min(desired, npad)
    while t > 128 and npad % t != 0:
        t //= 2
    return t


def _chip_defaults():
    try:
        kind = jax.devices()[0].device_kind.lower()
    except Exception:  # pragma: no cover - defensive
        kind = ""
    if "v7" in kind or "7x" in kind:
        # v7x: 64 MiB VMEM per TensorCore -> lean tiles; TM=128 keeps the
        # row-block count >= 2 so the "parallel" axis uses both TCs.
        return {"tm": 128, "tk": 512, "vmem_cap": 48 << 20}
    # v5e / v6e: 128 MiB physical VMEM -> bigger tiles, fewer grid steps.
    return {"tm": 256, "tk": 1024, "vmem_cap": 100 << 20}


def _vmem_bytes(tm, tk, fpad, cap):
    est = 2 * tm * tk * 1            # adj int8 block, double-buffered
    est += 2 * tk * fpad * 4         # h key block, double-buffered
    est += 2 * (tm + tk) * 4         # s / t blocks
    est += 2 * tm * fpad * 4         # output block
    est += tm * (fpad + 1) * 4       # acc / denom scratch
    est += 8 * tm * tk * 4           # live (TM, TK) f32 intermediates
    est += 4 << 20                   # headroom
    return int(min(max(est, 24 << 20), cap))


# ----------------------------------------------------------------------------
# Forward
# ----------------------------------------------------------------------------
def gat_layer_forward(x, adj, M, params, concat=True, row_tile=None, key_tile=None):
    """Pallas implementation of GATLayer.forward.  M is unused (matches torch)."""
    del M  # unused in the reference forward pass
    n, fin = x.shape
    fout = params["w"].shape[1]
    f32 = jnp.float32

    cfg = _chip_defaults()
    tm_want = row_tile if row_tile is not None else cfg["tm"]
    tk_want = key_tile if key_tile is not None else cfg["tk"]

    fpad = _round_up(max(fout, 128), 128)    # lane-dense feature dim
    npad = _round_up(max(n, 128), 128)       # padded node count (rows & keys)

    tm = _pick_tile(npad, tm_want)
    tk = _pick_tile(npad, tk_want)
    nb_rows = npad // tm
    nb_keys = npad // tk

    # Zero-pad Fout: padded h columns are 0, padded a_* entries are 0 -> exact.
    w = jnp.zeros((fin, fpad), f32).at[:, :fout].set(params["w"].astype(f32))
    b = jnp.zeros((1, fpad), f32).at[:, :fout].set(
        params["b"].reshape(1, -1).astype(f32))
    a_s = jnp.zeros((1, fpad), f32).at[:, :fout].set(
        params["a_self"].reshape(1, -1).astype(f32))
    a_n = jnp.zeros((1, fpad), f32).at[:, :fout].set(
        params["a_neighs"].reshape(1, -1).astype(f32))

    # Zero-pad nodes: pad rows/cols of adj are 0 -> masked out everywhere.
    x32 = jnp.zeros((npad, fin), f32).at[:n, :].set(x.astype(f32))
    adj_i8 = jnp.zeros((npad, npad), jnp.int8).at[:n, :n].set(
        (adj > 0).astype(jnp.int8))
    beta = params["beta"].astype(f32)

    # ---- pass 1: projection (h, s, t) -----------------------------------
    h_all, s_col, t_col = pl.pallas_call(
        _proj_kernel,
        out_shape=(jax.ShapeDtypeStruct((npad, fpad), f32),
                   jax.ShapeDtypeStruct((npad, 1), f32),
                   jax.ShapeDtypeStruct((npad, 1), f32)),
        grid=(nb_rows,),
        in_specs=[
            pl.BlockSpec((tm, fin), lambda i: (i, 0)),     # x row block
            pl.BlockSpec((fin, fpad), lambda i: (0, 0)),   # W (padded)
            pl.BlockSpec((1, fpad), lambda i: (0, 0)),     # b
            pl.BlockSpec((1, fpad), lambda i: (0, 0)),     # a_self
            pl.BlockSpec((1, fpad), lambda i: (0, 0)),     # a_neighs
        ],
        out_specs=(pl.BlockSpec((tm, fpad), lambda i: (i, 0)),
                   pl.BlockSpec((tm, 1), lambda i: (i, 0)),
                   pl.BlockSpec((tm, 1), lambda i: (i, 0))),
        compiler_params=pltpu.CompilerParams(
            dimension_semantics=("parallel",)),
    )(x32, w, b, a_s, a_n)

    t_row = t_col.reshape(1, npad)   # same flat order; no transpose cost

    # ---- pass 2: attention + aggregation ---------------------------------
    out = pl.pallas_call(
        _make_attn_kernel(apply_elu=bool(concat)),
        out_shape=jax.ShapeDtypeStruct((npad, fpad), f32),
        grid=(nb_rows, nb_keys),
        in_specs=[
            pl.BlockSpec((tm, 1), lambda i, k: (i, 0)),          # s (query rows)
            pl.BlockSpec((1, tk), lambda i, k: (0, k)),          # t^T (key block)
            pl.BlockSpec((tm, tk), lambda i, k: (i, k)),         # adj int8 block
            pl.BlockSpec((tk, fpad), lambda i, k: (k, 0)),       # h key block
            pl.BlockSpec(memory_space=pltpu.MemorySpace.SMEM),   # beta scalar
        ],
        out_specs=pl.BlockSpec((tm, fpad), lambda i, k: (i, 0)),
        scratch_shapes=[pltpu.VMEM((tm, 1), f32),      # softmax denom
                        pltpu.VMEM((tm, fpad), f32)],  # aggregation accumulator
        compiler_params=pltpu.CompilerParams(
            dimension_semantics=("parallel", "arbitrary"),
            vmem_limit_bytes=_vmem_bytes(tm, tk, fpad, cfg["vmem_cap"]),
        ),
    )(s_col, t_row, adj_i8, h_all, beta)

    return out[:n, :fout]


# ----------------------------------------------------------------------------
# Parameter init + pure-JAX reference (mirrors the torch module)
# ----------------------------------------------------------------------------
def init_params(key, in_features, out_features):
    k1, k2, k3, k4, k5 = jax.random.split(key, 5)

    def xavier(k, shape, gain=1.0):
        fan_in, fan_out = shape[0], shape[1]
        a = gain * jnp.sqrt(6.0 / (fan_in + fan_out))
        return jax.random.uniform(k, shape, jnp.float32, -a, a)

    lr_gain = jnp.sqrt(2.0 / (1.0 + 0.2 ** 2))   # calculate_gain('leaky_relu', 0.2)
    return {
        "w": xavier(k1, (in_features, out_features)),   # linear weight (x @ W layout)
        "b": jax.random.uniform(k2, (out_features,), jnp.float32,
                                -1.0 / jnp.sqrt(in_features),
                                1.0 / jnp.sqrt(in_features)),
        "a_self": xavier(k3, (out_features, 1), lr_gain),
        "a_neighs": xavier(k4, (out_features, 1), lr_gain),
        "beta": jax.random.uniform(k5, (1,), jnp.float32, 0.0, 1.0),
        # note: self.a (out_features, 3327) is never used in forward -> omitted
    }


def gat_reference(x, adj, params, concat=True):
    h = x @ params["w"] + params["b"]
    s = h @ params["a_self"]
    t = h @ params["a_neighs"]
    cos = (s @ t.T) / (jnp.abs(s) @ jnp.abs(t).T + 1e-7)
    mask = jnp.where(cos >= 0, cos, 0.2 * cos)
    masked = params["beta"][0] * mask
    logits = jnp.where(adj > 0, masked, -9e15)
    attention = jax.nn.softmax(logits, axis=1)
    h_prime = attention @ h
    return jax.nn.elu(h_prime) if concat else h_prime


if __name__ == "__main__":
    key = jax.random.PRNGKey(0)
    k_params, k_x, k_adj, k_m = jax.random.split(key, 4)

    N = 300            # deliberately NOT a multiple of 128 -> exercises padding
    in_features = 16
    out_features = 32

    params = init_params(k_params, in_features, out_features)

    x = jax.random.normal(k_x, (N, in_features), jnp.float32)
    adj = (jax.random.uniform(k_adj, (N, N)) < 0.2).astype(jnp.float32)
    adj = jnp.clip(adj + jnp.eye(N, dtype=jnp.float32), 0.0, 1.0)  # self loops
    M = jax.random.normal(k_m, (N, N), jnp.float32)   # unused (parity with torch)

    out = gat_layer_forward(x, adj, M, params, concat=True)
    out = jax.block_until_ready(out)

    ref = gat_reference(x, adj, params, concat=True)
    assert out.shape == (N, out_features)
    assert jnp.allclose(out, ref, rtol=1e-4, atol=1e-4), "mismatch vs reference"

    print("KERNEL_OK")
</pallas_src>

<mosaic_0001>
module attributes {stable_mosaic.version = 11 : i64} {
  func.func @_proj_kernel(%arg0: i32, %arg1: memref<128x16xf32, #tpu.memory_space<vmem>>, %arg2: memref<16x128xf32, #tpu.memory_space<vmem>>, %arg3: memref<1x128xf32, #tpu.memory_space<vmem>>, %arg4: memref<1x128xf32, #tpu.memory_space<vmem>>, %arg5: memref<1x128xf32, #tpu.memory_space<vmem>>, %arg6: memref<128x128xf32, #tpu.memory_space<vmem>>, %arg7: memref<128x1xf32, #tpu.memory_space<vmem>>, %arg8: memref<128x1xf32, #tpu.memory_space<vmem>>) attributes {dimension_semantics = [#tpu.dimension_semantics<parallel>], iteration_bounds = array<i64: 3>, scalar_prefetch = 0 : i64, scratch_operands = 0 : i64, tpu.core_type = #tpu.core_type<tc>, window_params = [{transform_indices = @transform_0, window_bounds = array<i64: 128, 16>}, {pipeline_mode = #tpu.pipeline_mode<synchronous>, transform_indices = @transform_1, window_bounds = array<i64: 16, 128>}, {pipeline_mode = #tpu.pipeline_mode<synchronous>, transform_indices = @transform_2, window_bounds = array<i64: 1, 128>}, {pipeline_mode = #tpu.pipeline_mode<synchronous>, transform_indices = @transform_3, window_bounds = array<i64: 1, 128>}, {pipeline_mode = #tpu.pipeline_mode<synchronous>, transform_indices = @transform_4, window_bounds = array<i64: 1, 128>}, {transform_indices = @transform_5, window_bounds = array<i64: 128, 128>}, {transform_indices = @transform_6, window_bounds = array<i64: 128, 1>}, {transform_indices = @transform_7, window_bounds = array<i64: 128, 1>}]} {
    %c0 = arith.constant 0 : index
    %c0_0 = arith.constant 0 : index
    %0 = vector.load %arg1[%c0, %c0_0] : memref<128x16xf32, #tpu.memory_space<vmem>>, vector<128x16xf32>
    %c0_1 = arith.constant 0 : index
    %c0_2 = arith.constant 0 : index
    %1 = vector.load %arg2[%c0_1, %c0_2] : memref<16x128xf32, #tpu.memory_space<vmem>>, vector<16x128xf32>
    %cst = arith.constant dense<0.000000e+00> : vector<128x128xf32>
    %2 = tpu.matmul %0, %1, %cst {dimension_numbers = #tpu.dot_dimension_numbers<[1], [0], [0], [1], [0, 0, 1, 1], [], []>} : vector<128x16xf32>, vector<16x128xf32>, vector<128x128xf32> -> vector<128x128xf32>
    %c0_3 = arith.constant 0 : index
    %c0_4 = arith.constant 0 : index
    %3 = vector.load %arg3[%c0_3, %c0_4] : memref<1x128xf32, #tpu.memory_space<vmem>>, vector<1x128xf32>
    %4 = vector.broadcast %3 : vector<1x128xf32> to vector<128x128xf32>
    %5 = arith.addf %2, %4 : vector<128x128xf32>
    %c0_5 = arith.constant 0 : index
    %c0_6 = arith.constant 0 : index
    %6 = vector.load %arg6[%c0_5, %c0_6] : memref<128x128xf32, #tpu.memory_space<vmem>>, vector<128x128xf32>
    tpu.vector_store %arg6[%c0_5, %c0_6], %5 {strides = array<i32>} : memref<128x128xf32, #tpu.memory_space<vmem>>, vector<128x128xf32>,
    %c0_7 = arith.constant 0 : index
    %c0_8 = arith.constant 0 : index
    %7 = vector.load %arg4[%c0_7, %c0_8] : memref<1x128xf32, #tpu.memory_space<vmem>>, vector<1x128xf32>
    %8 = vector.broadcast %7 : vector<1x128xf32> to vector<128x128xf32>
    %9 = arith.mulf %5, %8 : vector<128x128xf32>
    %cst_9 = arith.constant dense<0.000000e+00> : vector<128xf32>
    %10 = vector.multi_reduction <add>, %9, %cst_9 [1] : vector<128x128xf32> to vector<128xf32>
    %11 = vector.shape_cast %10 : vector<128xf32> to vector<128x1xf32>
    %c0_10 = arith.constant 0 : index
    %c0_11 = arith.constant 0 : index
    %12 = vector.load %arg7[%c0_10, %c0_11] : memref<128x1xf32, #tpu.memory_space<vmem>>, vector<128x1xf32>
    tpu.vector_store %arg7[%c0_10, %c0_11], %11 {strides = array<i32>} : memref<128x1xf32, #tpu.memory_space<vmem>>, vector<128x1xf32>,
    %c0_12 = arith.constant 0 : index
    %c0_13 = arith.constant 0 : index
    %13 = vector.load %arg5[%c0_12, %c0_13] : memref<1x128xf32, #tpu.memory_space<vmem>>, vector<1x128xf32>
    %14 = vector.broadcast %13 : vector<1x128xf32> to vector<128x128xf32>
    %15 = arith.mulf %5, %14 : vector<128x128xf32>
    %cst_14 = arith.constant dense<0.000000e+00> : vector<128xf32>
    %16 = vector.multi_reduction <add>, %15, %cst_14 [1] : vector<128x128xf32> to vector<128xf32>
    %17 = vector.shape_cast %16 : vector<128xf32> to vector<128x1xf32>
    %c0_15 = arith.constant 0 : index
    %c0_16 = arith.constant 0 : index
    %18 = vector.load %arg8[%c0_15, %c0_16] : memref<128x1xf32, #tpu.memory_space<vmem>>, vector<128x1xf32>
    tpu.vector_store %arg8[%c0_15, %c0_16], %17 {strides = array<i32>} : memref<128x1xf32, #tpu.memory_space<vmem>>, vector<128x1xf32>,
    return
  }
  func.func @transform_0(%arg0: i32) -> (i32, i32) {
    %c0_i32 = arith.constant 0 : i32
    %c0_i32_0 = arith.constant 0 : i32
    return %arg0, %c0_i32 : i32, i32
  }
  func.func @transform_1(%arg0: i32) -> (i32, i32) {
    %c0_i32 = arith.constant 0 : i32
    %c0_i32_0 = arith.constant 0 : i32
    %c0_i32_1 = arith.constant 0 : i32
    return %c0_i32, %c0_i32_0 : i32, i32
  }
  func.func @transform_2(%arg0: i32) -> (i32, i32) {
    %c0_i32 = arith.constant 0 : i32
    %c0_i32_0 = arith.constant 0 : i32
    %c0_i32_1 = arith.constant 0 : i32
    return %c0_i32, %c0_i32_0 : i32, i32
  }
  func.func @transform_3(%arg0: i32) -> (i32, i32) {
    %c0_i32 = arith.constant 0 : i32
    %c0_i32_0 = arith.constant 0 : i32
    %c0_i32_1 = arith.constant 0 : i32
    return %c0_i32, %c0_i32_0 : i32, i32
  }
  func.func @transform_4(%arg0: i32) -> (i32, i32) {
    %c0_i32 = arith.constant 0 : i32
    %c0_i32_0 = arith.constant 0 : i32
    %c0_i32_1 = arith.constant 0 : i32
    return %c0_i32, %c0_i32_0 : i32, i32
  }
  func.func @transform_5(%arg0: i32) -> (i32, i32) {
    %c0_i32 = arith.constant 0 : i32
    %c0_i32_0 = arith.constant 0 : i32
    return %arg0, %c0_i32 : i32, i32
  }
  func.func @transform_6(%arg0: i32) -> (i32, i32) {
    %c0_i32 = arith.constant 0 : i32
    %c0_i32_0 = arith.constant 0 : i32
    return %arg0, %c0_i32 : i32, i32
  }
  func.func @transform_7(%arg0: i32) -> (i32, i32) {
    %c0_i32 = arith.constant 0 : i32
    %c0_i32_0 = arith.constant 0 : i32
    return %arg0, %c0_i32 : i32, i32
  }
}

</mosaic_0001>

<llo_original>
// kernel: tpu_custom_call.1
$region0: #{tpu_custom_call.1}
  #allocation0 [shape = 'u32[]', space=smem, size = 0x4, offset = 0x4, fixed_abs, tag = 'smem constant byte address 0x4 - core index']
  #allocation1 [shape = 'u32[72,128]{1,0:T(1,128)}', space=vmem, size = 0x9000, scoped, tag = 'internal scratch']
  %s0 = inlined_call_operand.vmem [shape: f32[384,16], index: 0, kind: input, shape index: {}]
  %s1 = inlined_call_operand.vmem [shape: f32[16,128], index: 1, kind: input, shape index: {}]
  %s2 = inlined_call_operand.vmem [shape: f32[1,128], index: 2, kind: input, shape index: {}]
  %s3 = inlined_call_operand.vmem [shape: f32[1,128], index: 3, kind: input, shape index: {}]
  %s4 = inlined_call_operand.vmem [shape: f32[1,128], index: 4, kind: input, shape index: {}]
  %s5 = inlined_call_operand.hbm [shape: f32[384,128], index: 5, kind: output, shape index: {0}]
  %s6 = inlined_call_operand.vmem [shape: f32[384,1], index: 6, kind: output, shape index: {1}]
  %s7 = inlined_call_operand.vmem [shape: f32[384,1], index: 7, kind: output, shape index: {2}]
  %8 = xla_tuple %s5, %s6, %s7
  %s9 = sld [smem:[#allocation0]]
  $region69: #{tpu_custom_call.1} parent=0
    _
  %s11 = ssub.s32 1, %s9
  %s12 = scalar_select 0, %s11, %s9
  $region1: #{tpu_custom_call.1} parent=0
    #allocation2 [shape = 'u8[131072]{0}', space=vmem, size = 0x20000, scoped, tag = 'output window, operand 0']
    #allocation3 [shape = 's32[2]{0}', space=sflag, size = 0x8, scoped, tag = 'scoped memory for tpu_custom_call.1']
    %13 = vsyncpa [#allocation3], 0
    %s14 = scalar_lea.sflag [#allocation3], 1
    %15 = vsyncpa %s14, 0
    loop: start=0, step=1, limit=5
    $region2: #{tpu_custom_call.1} parent=1 // loop_pre_header
      _
    $region3: #{tpu_custom_call.1} parent=1 // loop_header
      %s17 = sphi 0, %s21
      %p18 = scmp.ge.s32.totalorder %s17, 5
      %s27 = sphi 0, %s29
      %s30 = sphi 0, %s27
      %s31 = sphi 0, %s30
      %s47 = sphi 0, %s31
      %s51 = sphi 0, %s51
      %s53 = sphi 0, %s51
      %s54 = sphi 0, %s53
      %s68 = sphi 0, %s54
      %s72 = sphi 0, %s72
      %s74 = sphi 0, %s72
      %s75 = sphi 0, %s74
      %s89 = sphi 0, %s75
      %s93 = sphi 0, %s93
      %s95 = sphi 0, %s93
      %s96 = sphi 0, %s95
      %s110 = sphi 0, %s96
      %s114 = sphi 0, %s114
      %s116 = sphi 0, %s114
      %s117 = sphi 0, %s116
      %s131 = sphi 0, %s117
      %s137 = sphi 0, %s139
      %s140 = sphi 0, %s137
      %s141 = sphi 0, %s140
      %s157 = sphi 0, %s141
      %s163 = sphi 0, %s165
      %s166 = sphi 0, %s163
      %s167 = sphi 0, %s166
      %s183 = sphi 0, %s167
      %s189 = sphi 0, %s191
      %s192 = sphi 0, %s189
      %s193 = sphi 0, %s192
      %s209 = sphi 0, %s193
    $region4: #{tpu_custom_call.1} parent=1 // loop_header_branch
      %20 = sbr.rel (%p18) target = $region8
    $region5: #{tpu_custom_call.1} parent=1 // loop_body
      %s22 = ssub.s32 %s17, 1
      %s23 = ssub.s32 %s17, 2
      %s24 = sadd.s32 %s17, 1
      %s25 = ssub.s32 %s17, %s24
      %p26 = scmp.eq.s32.totalorder %s25, 0
      %s28 = sadd.s32 %s27, 1
      %s29 = scalar_select %p26, %s27, %s28
      %p32 = pneg %p26
      %p33 = scmp.eq.s32.totalorder %s17, 2
      %p34 = por %p32, %p33
      %p35 = scmp.ne.s32.totalorder %s27, %s30
      %p36 = scmp.eq.s32.totalorder %s17, 0
      %p37 = por %p35, %p36
      %p38 = scmp.ne.s32.totalorder %s27, %s30
      %p39 = scmp.eq.s32.totalorder %s22, 2
      %p40 = por %p38, %p39
      %p41 = scmp.ne.s32.totalorder %s30, %s31
      %p42 = scmp.eq.s32.totalorder %s22, 0
      %p43 = por %p41, %p42
      %p44 = scmp.ne.s32.totalorder %s30, %s31
      %p45 = scmp.eq.s32.totalorder %s23, 2
      %p46 = por %p44, %p45
      %p48 = scmp.ne.s32.totalorder %s31, %s47
      %p49 = scmp.eq.s32.totalorder %s23, 0
      %p50 = por %p48, %p49
      %s52 = sadd.s32 %s51, 1
      %p55 = scmp.eq.s32.totalorder %s17, 2
      %p56 = scmp.ne.s32.totalorder %s51, %s53
      %p57 = scmp.eq.s32.totalorder %s17, 0
      %p58 = por %p56, %p57
      %p59 = scmp.ne.s32.totalorder %s51, %s53
      %p60 = scmp.eq.s32.totalorder %s22, 2
      %p61 = por %p59, %p60
      %p62 = scmp.ne.s32.totalorder %s53, %s54
      %p63 = scmp.eq.s32.totalorder %s22, 0
      %p64 = por %p62, %p63
      %p65 = scmp.ne.s32.totalorder %s53, %s54
      %p66 = scmp.eq.s32.totalorder %s23, 2
      %p67 = por %p65, %p66
      %p69 = scmp.ne.s32.totalorder %s54, %s68
      %p70 = scmp.eq.s32.totalorder %s23, 0
      %p71 = por %p69, %p70
      %s73 = sadd.s32 %s72, 1
      %p76 = scmp.eq.s32.totalorder %s17, 2
      %p77 = scmp.ne.s32.totalorder %s72, %s74
      %p78 = scmp.eq.s32.totalorder %s17, 0
      %p79 = por %p77, %p78
      %p80 = scmp.ne.s32.totalorder %s72, %s74
      %p81 = scmp.eq.s32.totalorder %s22, 2
      %p82 = por %p80, %p81
      %p83 = scmp.ne.s32.totalorder %s74, %s75
      %p84 = scmp.eq.s32.totalorder %s22, 0
      %p85 = por %p83, %p84
      %p86 = scmp.ne.s32.totalorder %s74, %s75
      %p87 = scmp.eq.s32.totalorder %s23, 2
      %p88 = por %p86, %p87
      %p90 = scmp.ne.s32.totalorder %s75, %s89
      %p91 = scmp.eq.s32.totalorder %s23, 0
      %p92 = por %p90, %p91
      %s94 = sadd.s32 %s93, 1
      %p97 = scmp.eq.s32.totalorder %s17, 2
      %p98 = scmp.ne.s32.totalorder %s93, %s95
      %p99 = scmp.eq.s32.totalorder %s17, 0
      %p100 = por %p98, %p99
      %p101 = scmp.ne.s32.totalorder %s93, %s95
      %p102 = scmp.eq.s32.totalorder %s22, 2
      %p103 = por %p101, %p102
      %p104 = scmp.ne.s32.totalorder %s95, %s96
      %p105 = scmp.eq.s32.totalorder %s22, 0
      %p106 = por %p104, %p105
      %p107 = scmp.ne.s32.totalorder %s95, %s96
      %p108 = scmp.eq.s32.totalorder %s23, 2
      %p109 = por %p107, %p108
      %p111 = scmp.ne.s32.totalorder %s96, %s110
      %p112 = scmp.eq.s32.totalorder %s23, 0
      %p113 = por %p111, %p112
      %s115 = sadd.s32 %s114, 1
      %p118 = scmp.eq.s32.totalorder %s17, 2
      %p119 = scmp.ne.s32.totalorder %s114, %s116
      %p120 = scmp.eq.s32.totalorder %s17, 0
      %p121 = por %p119, %p120
      %p122 = scmp.ne.s32.totalorder %s114, %s116
      %p123 = scmp.eq.s32.totalorder %s22, 2
      %p124 = por %p122, %p123
      %p125 = scmp.ne.s32.totalorder %s116, %s117
      %p126 = scmp.eq.s32.totalorder %s22, 0
      %p127 = por %p125, %p126
      %p128 = scmp.ne.s32.totalorder %s116, %s117
      %p129 = scmp.eq.s32.totalorder %s23, 2
      %p130 = por %p128, %p129
      %p132 = scmp.ne.s32.totalorder %s117, %s131
      %p133 = scmp.eq.s32.totalorder %s23, 0
      %p134 = por %p132, %p133
      %s135 = ssub.s32 %s17, %s24
      %p136 = scmp.eq.s32.totalorder %s135, 0
      %s138 = sadd.s32 %s137, 1
      %s139 = scalar_select %p136, %s137, %s138
      %p142 = pneg %p136
      %p143 = scmp.eq.s32.totalorder %s17, 2
      %p144 = por %p142, %p143
      %p145 = scmp.ne.s32.totalorder %s137, %s140
      %p146 = scmp.eq.s32.totalorder %s17, 0
      %p147 = por %p145, %p146
      %p148 = scmp.ne.s32.totalorder %s137, %s140
      %p149 = scmp.eq.s32.totalorder %s22, 2
      %p150 = por %p148, %p149
      %p151 = scmp.ne.s32.totalorder %s140, %s141
      %p152 = scmp.eq.s32.totalorder %s22, 0
      %p153 = por %p151, %p152
      %p154 = scmp.ne.s32.totalorder %s140, %s141
      %p155 = scmp.eq.s32.totalorder %s23, 2
      %p156 = por %p154, %p155
      %p158 = scmp.ne.s32.totalorder %s141, %s157
      %p159 = scmp.eq.s32.totalorder %s23, 0
      %p160 = por %p158, %p159
      %s161 = ssub.s32 %s17, %s24
      %p162 = scmp.eq.s32.totalorder %s161, 0
      %s164 = sadd.s32 %s163, 1
      %s165 = scalar_select %p162, %s163, %s164
      %p168 = pneg %p162
      %p169 = scmp.eq.s32.totalorder %s17, 2
      %p170 = por %p168, %p169
      %p171 = scmp.ne.s32.totalorder %s163, %s166
      %p172 = scmp.eq.s32.totalorder %s17, 0
      %p173 = por %p171, %p172
      %p174 = scmp.ne.s32.totalorder %s163, %s166
      %p175 = scmp.eq.s32.totalorder %s22, 2
      %p176 = por %p174, %p175
      %p177 = scmp.ne.s32.totalorder %s166, %s167
      %p178 = scmp.eq.s32.totalorder %s22, 0
      %p179 = por %p177, %p178
      %p180 = scmp.ne.s32.totalorder %s166, %s167
      %p181 = scmp.eq.s32.totalorder %s23, 2
      %p182 = por %p180, %p181
      %p184 = scmp.ne.s32.totalorder %s167, %s183
      %p185 = scmp.eq.s32.totalorder %s23, 0
      %p186 = por %p184, %p185
      %s187 = ssub.s32 %s17, %s24
      %p188 = scmp.eq.s32.totalorder %s187, 0
      %s190 = sadd.s32 %s189, 1
      %s191 = scalar_select %p188, %s189, %s190
      %p194 = pneg %p188
      %p195 = scmp.eq.s32.totalorder %s17, 2
      %p196 = por %p194, %p195
      %p197 = scmp.ne.s32.totalorder %s189, %s192
      %p198 = scmp.eq.s32.totalorder %s17, 0
      %p199 = por %p197, %p198
      %p200 = scmp.ne.s32.totalorder %s189, %s192
      %p201 = scmp.eq.s32.totalorder %s22, 2
      %p202 = por %p200, %p201
      %p203 = scmp.ne.s32.totalorder %s192, %s193
      %p204 = scmp.eq.s32.totalorder %s22, 0
      %p205 = por %p203, %p204
      %p206 = scmp.ne.s32.totalorder %s192, %s193
      %p207 = scmp.eq.s32.totalorder %s23, 2
      %p208 = por %p206, %p207
      %p210 = scmp.ne.s32.totalorder %s193, %s209
      %p211 = scmp.eq.s32.totalorder %s23, 0
      %p212 = por %p210, %p211
      %p213 = scmp.le.s32.totalorder 1, %s17
      %p214 = scmp.lt.s32.totalorder %s17, 4
      %p215 = pnand %p213, %p214
      %p216 = pneg %p215
      // Predicated region
      $region9: #{tpu_custom_call.1} parent=5 // pred_check
        _
      $region10: #{tpu_custom_call.1} parent=5 // pred_check_branch
        %218 = sbr.rel (%p215) target = $region12
      $region11: #{tpu_custom_call.1} parent=5 // pred_region
        %s219 = ssub.s32 %s17, 1
        // Predicated region
        $region13: #{tpu_custom_call.1} parent=11 // pred_check
          %p220 = pneg %p64
        $region14: #{tpu_custom_call.1} parent=11 // pred_check_branch
          %222 = sbr.rel (%p220) target = $region16
        $region15: #{tpu_custom_call.1} parent=11 // pred_region
          _
        $region16: #{tpu_custom_call.1} parent=11 // pred_fallthru
          _
        // Predicated region
        $region17: #{tpu_custom_call.1} parent=11 // pred_check
          %p223 = pneg %p85
        $region18: #{tpu_custom_call.1} parent=11 // pred_check_branch
          %225 = sbr.rel (%p223) target = $region20
        $region19: #{tpu_custom_call.1} parent=11 // pred_region
          _
        $region20: #{tpu_custom_call.1} parent=11 // pred_fallthru
          _
        // Predicated region
        $region21: #{tpu_custom_call.1} parent=11 // pred_check
          %p226 = pneg %p106
        $region22: #{tpu_custom_call.1} parent=11 // pred_check_branch
          %228 = sbr.rel (%p226) target = $region24
        $region23: #{tpu_custom_call.1} parent=11 // pred_region
          _
        $region24: #{tpu_custom_call.1} parent=11 // pred_fallthru
          _
        // Predicated region
        $region25: #{tpu_custom_call.1} parent=11 // pred_check
          %p229 = pneg %p127
        $region26: #{tpu_custom_call.1} parent=11 // pred_check_branch
          %231 = sbr.rel (%p229) target = $region28
        $region27: #{tpu_custom_call.1} parent=11 // pred_region
          _
        $region28: #{tpu_custom_call.1} parent=11 // pred_fallthru
          _
      $region12: #{tpu_custom_call.1} parent=5 // pred_fallthru
        _
      %p232 = scmp.lt.s32.totalorder %s17, 3
      // Predicated region
      $region29: #{tpu_custom_call.1} parent=5 // pred_check
        %p233 = pneg %p232
      $region30: #{tpu_custom_call.1} parent=5 // pred_check_branch
        %235 = sbr.rel (%p233) target = $region32
      $region31: #{tpu_custom_call.1} parent=5 // pred_region
        // Predicated region
        $region33: #{tpu_custom_call.1} parent=31 // pred_check
          %p236 = pneg %p37
        $region34: #{tpu_custom_call.1} parent=31 // pred_check_branch
          %238 = sbr.rel (%p236) target = $region36
        $region35: #{tpu_custom_call.1} parent=31 // pred_region
          %s239 = smul.u32 16, %s17
          %p240 = scmp.lt.s32.totalorder %s239, 47
          %s241 = scalar_select %p240, %s239, 47
          %s242 = smul.addr %s241, 8
          %s243 = scalar_lea.vmem %s0, %s242
          %s244 = smul.u32 16, %s17
        $region36: #{tpu_custom_call.1} parent=31 // pred_fallthru
          _
      $region32: #{tpu_custom_call.1} parent=5 // pred_fallthru
        _
      %p245 = scmp.le.s32.totalorder 1, %s17
      %p246 = scmp.lt.s32.totalorder %s17, 4
      %p247 = pnand %p245, %p246
      %p248 = pneg %p247
      // Predicated region
      $region37: #{tpu_custom_call.1} parent=5 // pred_check
        _
      $region38: #{tpu_custom_call.1} parent=5 // pred_check_branch
        %250 = sbr.rel (%p247) target = $region40
      $region39: #{tpu_custom_call.1} parent=5 // pred_region
        %s251 = ssub.s32 %s17, 1
        %s252 = smul.u32 16, %s22
        %p253 = scmp.lt.s32.totalorder %s252, 47
        %s254 = scalar_select %p253, %s252, 47
        %s255 = smul.addr %s254, 8
        %s256 = scalar_lea.vmem %s0, %s255
        %p257 = pneg %p43
        %p258 = pneg %p40
        %p259 = pneg %p64
        %p260 = pneg %p61
        %p261 = pneg %p85
        %p262 = pneg %p82
        %p263 = pneg %p106
        %p264 = pneg %p103
        %p265 = pneg %p127
        %p266 = pneg %p124
        %p267 = pneg %p153
        %p268 = pneg %p150
        %s269 = sand.u32 %s140, 1
        %s270 = scalar_lea.sflag [#allocation3], %s269
        %s271 = sand.u32 %s140, 1
        %s272 = smul.addr %s271, 128
        %s273 = scalar_lea.vmem [#allocation2], %s272
        %p274 = pneg %p179
        %p275 = pneg %p176
        %s276 = smul.u32 16, %s22
        %p277 = scmp.lt.s32.totalorder %s276, 47
        %s278 = scalar_select %p277, %s276, 47
        %s279 = smul.addr %s278, 8
        %s280 = scalar_lea.vmem %s6, %s279
        %p281 = pneg %p205
        %p282 = pneg %p202
        %s283 = smul.u32 16, %s22
        %p284 = scmp.lt.s32.totalorder %s283, 47
        %s285 = scalar_select %p284, %s283, 47
        %s286 = smul.addr %s285, 8
        %s287 = scalar_lea.vmem %s7, %s286
        %s288 = smul.u32 16, %s22
        %p289 = scmp.lt.s32.totalorder %s288, 47
        %s290 = scalar_select %p289, %s288, 47
        %s291 = smul.addr %s290, 8
        %s292 = scalar_lea.vmem %s0, %s291
        %s293 = smul.u32 16, %s22
        %s294 = smul.u32 16, %s22
        %s295 = smul.u32 16, %s22
        %p296 = scmp.lt.s32.totalorder %s295, 47
        %s297 = scalar_select %p296, %s295, 47
        %s298 = smul.addr %s297, 8
        %s299 = scalar_lea.vmem %s6, %s298
        %s300 = smul.u32 16, %s22
        %s301 = smul.u32 16, %s22
        %p302 = scmp.lt.s32.totalorder %s301, 47
        %s303 = scalar_select %p302, %s301, 47
        %s304 = smul.addr %s303, 8
        %s305 = scalar_lea.vmem %s7, %s304
        %s306 = smul.u32 16, %s22
        %v307 = vld [vmem:[%s292] sm:$0xff]
        %v308 = vld [vmem:[%s292 + $0x8] sm:$0xff]
        %v309 = vld [vmem:[%s292 + $0x10] sm:$0xff]
        %v310 = vld [vmem:[%s292 + $0x18] sm:$0xff]
        %v311 = vld [vmem:[%s292 + $0x20] sm:$0xff]
        %v312 = vld [vmem:[%s292 + $0x28] sm:$0xff]
        %v313 = vld [vmem:[%s292 + $0x30] sm:$0xff]
        %v314 = vld [vmem:[%s292 + $0x38] sm:$0xff]
        %v315 = vld [vmem:[%s292 + $0x40] sm:$0xff]
        %v316 = vld [vmem:[%s292 + $0x48] sm:$0xff]
        %v317 = vld [vmem:[%s292 + $0x50] sm:$0xff]
        %v318 = vld [vmem:[%s292 + $0x58] sm:$0xff]
        %v319 = vld [vmem:[%s292 + $0x60] sm:$0xff]
        %v320 = vld [vmem:[%s292 + $0x68] sm:$0xff]
        %v321 = vld [vmem:[%s292 + $0x70] sm:$0xff]
        %v322 = vld [vmem:[%s292 + $0x78] sm:$0xff]
        %v323 = vld [vmem:[%s1] sm:$0xff]
        %v324 = vld [vmem:[%s1 + $0x8] sm:$0xff]
        %v325 = vld [vmem:[%s2] sm:$0x1]
        %v327 = vperm.slane %v325, 0
        %vm329 = vcmask 130048
        %v331 = vsel %vm329, %v307, 0
        %v334 = vsel %vm329, %v308, 0
        %v337 = vsel %vm329, %v309, 0
        %v340 = vsel %vm329, %v310, 0
        %v343 = vsel %vm329, %v311, 0
        %v346 = vsel %vm329, %v312, 0
        %v349 = vsel %vm329, %v313, 0
        %v352 = vsel %vm329, %v314, 0
        %v355 = vsel %vm329, %v315, 0
        %v358 = vsel %vm329, %v316, 0
        %v361 = vsel %vm329, %v317, 0
        %v364 = vsel %vm329, %v318, 0
        %v367 = vsel %vm329, %v319, 0
        %v370 = vsel %vm329, %v320, 0
        %v373 = vsel %vm329, %v321, 0
        %v376 = vsel %vm329, %v322, 0
        %378 = vmatpush.msra.mxu0 0.0
        %379 = vmatpush.msra.mxu0 0.0
        %380 = vmatpush.msra.mxu0 0.0
        %381 = vmatpush.msra.mxu0 0.0
        %382 = vmatpush.msra.mxu0 0.0
        %383 = vmatpush.msra.mxu0 0.0
        %384 = vmatpush.msra.mxu0 0.0
        %385 = vmatpush.msra.mxu0 0.0
        %386 = vmatpush.msra.mxu0 0.0
        %387 = vmatpush.msra.mxu0 0.0
        %388 = vmatpush.msra.mxu0 0.0
        %389 = vmatpush.msra.mxu0 0.0
        %390 = vmatpush.msra.mxu0 0.0
        %391 = vmatpush.msra.mxu0 0.0
        %392 = vmatpush.msra.mxu0 %v324
        %393 = vmatpush.msra.mxu0 %v323
        %394 = vmatmul.f32.gmra.mxu0 %v331
        %v395 = vpop.f32.mrf.mxu0
        %v396 = vadd.f32 %v327, %v395
        %397 = vmatmul.f32.gmra.mxu0 %v334
        %v398 = vpop.f32.mrf.mxu0
        %v399 = vadd.f32 %v327, %v398
        %400 = vmatmul.f32.gmra.mxu0 %v337
        %v401 = vpop.f32.mrf.mxu0
        %v402 = vadd.f32 %v327, %v401
        %403 = vmatmul.f32.gmra.mxu0 %v340
        %v404 = vpop.f32.mrf.mxu0
        %v405 = vadd.f32 %v327, %v404
        %406 = vmatmul.f32.gmra.mxu0 %v343
        %v407 = vpop.f32.mrf.mxu0
        %v408 = vadd.f32 %v327, %v407
        %409 = vmatmul.f32.gmra.mxu0 %v346
        %v410 = vpop.f32.mrf.mxu0
        %v411 = vadd.f32 %v327, %v410
        %412 = vmatmul.f32.gmra.mxu0 %v349
        %v413 = vpop.f32.mrf.mxu0
        %v414 = vadd.f32 %v327, %v413
        %415 = vmatmul.f32.gmra.mxu0 %v352
        %v416 = vpop.f32.mrf.mxu0
        %v417 = vadd.f32 %v327, %v416
        %418 = vmatmul.f32.gmra.mxu0 %v355
        %v419 = vpop.f32.mrf.mxu0
        %v420 = vadd.f32 %v327, %v419
        %421 = vmatmul.f32.gmra.mxu0 %v358
        %v422 = vpop.f32.mrf.mxu0
        %v423 = vadd.f32 %v327, %v422
        %424 = vmatmul.f32.gmra.mxu0 %v361
        %v425 = vpop.f32.mrf.mxu0
        %v426 = vadd.f32 %v327, %v425
        %427 = vmatmul.f32.gmra.mxu0 %v364
        %v428 = vpop.f32.mrf.mxu0
        %v429 = vadd.f32 %v327, %v428
        %430 = vmatmul.f32.gmra.mxu0 %v367
        %v431 = vpop.f32.mrf.mxu0
        %v432 = vadd.f32 %v327, %v431
        %433 = vmatmul.f32.gmra.mxu0 %v370
        %v434 = vpop.f32.mrf.mxu0
        %v435 = vadd.f32 %v327, %v434
        %436 = vmatmul.f32.gmra.mxu0 %v373
        %v437 = vpop.f32.mrf.mxu0
        %v438 = vadd.f32 %v327, %v437
        %439 = vmatmul.f32.gmra.mxu0 %v376
        %v440 = vpop.f32.mrf.mxu0
        %v441 = vadd.f32 %v327, %v440
        %442 = vdwg.mxu0
        %443 = vst [vmem:[%s273] sm:$0xff] %v396
        %444 = vst [vmem:[%s273 + $0x8] sm:$0xff] %v399
        %445 = vst [vmem:[%s273 + $0x10] sm:$0xff] %v402
        %446 = vst [vmem:[%s273 + $0x18] sm:$0xff] %v405
        %447 = vst [vmem:[%s273 + $0x20] sm:$0xff] %v408
        %448 = vst [vmem:[%s273 + $0x28] sm:$0xff] %v411
        %449 = vst [vmem:[%s273 + $0x30] sm:$0xff] %v414
        %450 = vst [vmem:[%s273 + $0x38] sm:$0xff] %v417
        %451 = vst [vmem:[%s273 + $0x40] sm:$0xff] %v420
        %452 = vst [vmem:[%s273 + $0x48] sm:$0xff] %v423
        %453 = vst [vmem:[%s273 + $0x50] sm:$0xff] %v426
        %454 = vst [vmem:[%s273 + $0x58] sm:$0xff] %v429
        %455 = vst [vmem:[%s273 + $0x60] sm:$0xff] %v432
        %456 = vst [vmem:[%s273 + $0x68] sm:$0xff] %v435
        %457 = vst [vmem:[%s273 + $0x70] sm:$0xff] %v438
        %458 = vst [vmem:[%s273 + $0x78] sm:$0xff] %v441
        %v459 = vld [vmem:[%s3] sm:$0x1]
        %v461 = vperm.slane %v459, 0
        %v463 = vmul.f32 %v396, %v461
        %v464 = vmul.f32 %v399, %v461
        %v465 = vmul.f32 %v402, %v461
        %v466 = vmul.f32 %v405, %v461
        %v467 = vmul.f32 %v408, %v461
        %v468 = vmul.f32 %v411, %v461
        %v469 = vmul.f32 %v414, %v461
        %v470 = vmul.f32 %v417, %v461
        %v471 = vmul.f32 %v420, %v461
        %v472 = vmul.f32 %v423, %v461
        %v473 = vmul.f32 %v426, %v461
        %v474 = vmul.f32 %v429, %v461
        %v475 = vmul.f32 %v432, %v461
        %v476 = vmul.f32 %v435, %v461
        %v477 = vmul.f32 %v438, %v461
        %v478 = vmul.f32 %v441, %v461
        %479 = vadd.xlane.f32.xlu0 %v463
        %v480 = vpop.xlane.xlu0 %479
        %481 = vadd.xlane.f32.xlu0 %v464
        %v482 = vpop.xlane.xlu0 %481
        %483 = vadd.xlane.f32.xlu0 %v465
        %v484 = vpop.xlane.xlu0 %483
        %485 = vadd.xlane.f32.xlu0 %v466
        %v486 = vpop.xlane.xlu0 %485
        %487 = vadd.xlane.f32.xlu0 %v467
        %v488 = vpop.xlane.xlu0 %487
        %489 = vadd.xlane.f32.xlu0 %v468
        %v490 = vpop.xlane.xlu0 %489
        %491 = vadd.xlane.f32.xlu0 %v469
        %v492 = vpop.xlane.xlu0 %491
        %493 = vadd.xlane.f32.xlu0 %v470
        %v494 = vpop.xlane.xlu0 %493
        %495 = vadd.xlane.f32.xlu0 %v471
        %v496 = vpop.xlane.xlu0 %495
        %497 = vadd.xlane.f32.xlu0 %v472
        %v498 = vpop.xlane.xlu0 %497
        %499 = vadd.xlane.f32.xlu0 %v473
        %v500 = vpop.xlane.xlu0 %499
        %501 = vadd.xlane.f32.xlu0 %v474
        %v502 = vpop.xlane.xlu0 %501
        %503 = vadd.xlane.f32.xlu0 %v475
        %v504 = vpop.xlane.xlu0 %503
        %505 = vadd.xlane.f32.xlu0 %v476
        %v506 = vpop.xlane.xlu0 %505
        %507 = vadd.xlane.f32.xlu0 %v477
        %v508 = vpop.xlane.xlu0 %507
        %509 = vadd.xlane.f32.xlu0 %v478
        %v510 = vpop.xlane.xlu0 %509
        %vm511 = vcmask 7168
        %512 = vst.msk [vmem:[%s299] sm:$0xff] %vm511, %v480
        %513 = vst.msk [vmem:[%s299 + $0x8] sm:$0xff] %vm511, %v482
        %514 = vst.msk [vmem:[%s299 + $0x10] sm:$0xff] %vm511, %v484
        %515 = vst.msk [vmem:[%s299 + $0x18] sm:$0xff] %vm511, %v486
        %516 = vst.msk [vmem:[%s299 + $0x20] sm:$0xff] %vm511, %v488
        %517 = vst.msk [vmem:[%s299 + $0x28] sm:$0xff] %vm511, %v490
        %518 = vst.msk [vmem:[%s299 + $0x30] sm:$0xff] %vm511, %v492
        %519 = vst.msk [vmem:[%s299 + $0x38] sm:$0xff] %vm511, %v494
        %520 = vst.msk [vmem:[%s299 + $0x40] sm:$0xff] %vm511, %v496
        %521 = vst.msk [vmem:[%s299 + $0x48] sm:$0xff] %vm511, %v498
        %522 = vst.msk [vmem:[%s299 + $0x50] sm:$0xff] %vm511, %v500
        %523 = vst.msk [vmem:[%s299 + $0x58] sm:$0xff] %vm511, %v502
        %524 = vst.msk [vmem:[%s299 + $0x60] sm:$0xff] %vm511, %v504
        %525 = vst.msk [vmem:[%s299 + $0x68] sm:$0xff] %vm511, %v506
        %526 = vst.msk [vmem:[%s299 + $0x70] sm:$0xff] %vm511, %v508
        %527 = vst.msk [vmem:[%s299 + $0x78] sm:$0xff] %vm511, %v510
        %v528 = vld [vmem:[%s4] sm:$0x1]
        %v530 = vperm.slane %v528, 0
        %v532 = vmul.f32 %v396, %v530
        %v533 = vmul.f32 %v399, %v530
        %v534 = vmul.f32 %v402, %v530
        %v535 = vmul.f32 %v405, %v530
        %v536 = vmul.f32 %v408, %v530
        %v537 = vmul.f32 %v411, %v530
        %v538 = vmul.f32 %v414, %v530
        %v539 = vmul.f32 %v417, %v530
        %v540 = vmul.f32 %v420, %v530
        %v541 = vmul.f32 %v423, %v530
        %v542 = vmul.f32 %v426, %v530
        %v543 = vmul.f32 %v429, %v530
        %v544 = vmul.f32 %v432, %v530
        %v545 = vmul.f32 %v435, %v530
        %v546 = vmul.f32 %v438, %v530
        %v547 = vmul.f32 %v441, %v530
        %548 = vadd.xlane.f32.xlu0 %v532
        %v549 = vpop.xlane.xlu0 %548
        %550 = vadd.xlane.f32.xlu0 %v533
        %v551 = vpop.xlane.xlu0 %550
        %552 = vadd.xlane.f32.xlu0 %v534
        %v553 = vpop.xlane.xlu0 %552
        %554 = vadd.xlane.f32.xlu0 %v535
        %v555 = vpop.xlane.xlu0 %554
        %556 = vadd.xlane.f32.xlu0 %v536
        %v557 = vpop.xlane.xlu0 %556
        %558 = vadd.xlane.f32.xlu0 %v537
        %v559 = vpop.xlane.xlu0 %558
        %560 = vadd.xlane.f32.xlu0 %v538
        %v561 = vpop.xlane.xlu0 %560
        %562 = vadd.xlane.f32.xlu0 %v539
        %v563 = vpop.xlane.xlu0 %562
        %564 = vadd.xlane.f32.xlu0 %v540
        %v565 = vpop.xlane.xlu0 %564
        %566 = vadd.xlane.f32.xlu0 %v541
        %v567 = vpop.xlane.xlu0 %566
        %568 = vadd.xlane.f32.xlu0 %v542
        %v569 = vpop.xlane.xlu0 %568
        %570 = vadd.xlane.f32.xlu0 %v543
        %v571 = vpop.xlane.xlu0 %570
        %572 = vadd.xlane.f32.xlu0 %v544
        %v573 = vpop.xlane.xlu0 %572
        %574 = vadd.xlane.f32.xlu0 %v545
        %v575 = vpop.xlane.xlu0 %574
        %576 = vadd.xlane.f32.xlu0 %v546
        %v577 = vpop.xlane.xlu0 %576
        %578 = vadd.xlane.f32.xlu0 %v547
        %v579 = vpop.xlane.xlu0 %578
        %580 = vst.msk [vmem:[%s305] sm:$0xff] %vm511, %v549
        %581 = vst.msk [vmem:[%s305 + $0x8] sm:$0xff] %vm511, %v551
        %582 = vst.msk [vmem:[%s305 + $0x10] sm:$0xff] %vm511, %v553
        %583 = vst.msk [vmem:[%s305 + $0x18] sm:$0xff] %vm511, %v555
        %584 = vst.msk [vmem:[%s305 + $0x20] sm:$0xff] %vm511, %v557
        %585 = vst.msk [vmem:[%s305 + $0x28] sm:$0xff] %vm511, %v559
        %586 = vst.msk [vmem:[%s305 + $0x30] sm:$0xff] %vm511, %v561
        %587 = vst.msk [vmem:[%s305 + $0x38] sm:$0xff] %vm511, %v563
        %588 = vst.msk [vmem:[%s305 + $0x40] sm:$0xff] %vm511, %v565
        %589 = vst.msk [vmem:[%s305 + $0x48] sm:$0xff] %vm511, %v567
        %590 = vst.msk [vmem:[%s305 + $0x50] sm:$0xff] %vm511, %v569
        %591 = vst.msk [vmem:[%s305 + $0x58] sm:$0xff] %vm511, %v571
        %592 = vst.msk [vmem:[%s305 + $0x60] sm:$0xff] %vm511, %v573
        %593 = vst.msk [vmem:[%s305 + $0x68] sm:$0xff] %vm511, %v575
        %594 = vst.msk [vmem:[%s305 + $0x70] sm:$0xff] %vm511, %v577
        %595 = vst.msk [vmem:[%s305 + $0x78] sm:$0xff] %vm511, %v579
        %s596 = sand.u32 %s140, 1
        %s597 = scalar_lea.sflag [#allocation3], %s596
        %s598 = sand.u32 %s140, 1
        %s599 = smul.addr %s598, 128
        %s600 = scalar_lea.vmem [#allocation2], %s599
        %s601 = smul.u32 16, %s22
        %p602 = scmp.lt.s32.totalorder %s601, 47
        %s603 = scalar_select %p602, %s601, 47
        %s604 = smul.addr %s603, 8
        %s605 = scalar_lea.vmem %s6, %s604
        %s606 = smul.u32 16, %s22
        %p607 = scmp.lt.s32.totalorder %s606, 47
        %s608 = scalar_select %p607, %s606, 47
        %s609 = smul.addr %s608, 8
        %s610 = scalar_lea.vmem %s7, %s609
        // Predicated region
        $region41: #{tpu_custom_call.1} parent=39 // pred_check
          %p611 = pneg %p150
        $region42: #{tpu_custom_call.1} parent=39 // pred_check_branch
          %613 = sbr.rel (%p611) target = $region44
        $region43: #{tpu_custom_call.1} parent=39 // pred_region
          %s614 = smul.u32 16, %s22
          %616 = vsyncadd %s597, 0
          %s617 = smul.addr %s614, 8
          %s618 = scalar_lea.hbm %s5, %s617
          %s619 = sshll.u32 %s600, 4
          %s620 = int_to_ptr.vmem [resolvable:$true] %s619
          %s621 = sshll.u32 %s618, 4
          %s622 = int_to_ptr.hbm [resolvable:$true] %s621
          %627 = dma.vmem_to_hbm [thread:$0]  %s620, 2048, %s622, %s597, 128, 128, 8
        $region44: #{tpu_custom_call.1} parent=39 // pred_fallthru
          _
        // Predicated region
        $region45: #{tpu_custom_call.1} parent=39 // pred_check
          %p628 = pneg %p176
        $region46: #{tpu_custom_call.1} parent=39 // pred_check_branch
          %630 = sbr.rel (%p628) target = $region48
        $region47: #{tpu_custom_call.1} parent=39 // pred_region
          %s631 = smul.u32 16, %s22
        $region48: #{tpu_custom_call.1} parent=39 // pred_fallthru
          _
        // Predicated region
        $region49: #{tpu_custom_call.1} parent=39 // pred_check
          %p632 = pneg %p202
        $region50: #{tpu_custom_call.1} parent=39 // pred_check_branch
          %634 = sbr.rel (%p632) target = $region52
        $region51: #{tpu_custom_call.1} parent=39 // pred_region
          %s635 = smul.u32 16, %s22
        $region52: #{tpu_custom_call.1} parent=39 // pred_fallthru
          _
      $region40: #{tpu_custom_call.1} parent=5 // pred_fallthru
        _
      %p636 = scmp.le.s32.totalorder 2, %s17
      // Predicated region
      $region53: #{tpu_custom_call.1} parent=5 // pred_check
        %p637 = pneg %p636
      $region54: #{tpu_custom_call.1} parent=5 // pred_check_branch
        %639 = sbr.rel (%p637) target = $region56
      $region55: #{tpu_custom_call.1} parent=5 // pred_region
        %s640 = ssub.s32 %s17, 2
        // Predicated region
        $region57: #{tpu_custom_call.1} parent=55 // pred_check
          %p641 = pneg %p156
        $region58: #{tpu_custom_call.1} parent=55 // pred_check_branch
          %643 = sbr.rel (%p641) target = $region60
        $region59: #{tpu_custom_call.1} parent=55 // pred_region
          %s644 = sand.u32 %s141, 1
          %s645 = scalar_lea.sflag [#allocation3], %s644
          %s646 = sand.u32 %s141, 1
          %s647 = smul.addr %s646, 128
          %s648 = scalar_lea.vmem [#allocation2], %s647
          %650 = dma.done %s645, 2048
        $region60: #{tpu_custom_call.1} parent=55 // pred_fallthru
          _
        // Predicated region
        $region61: #{tpu_custom_call.1} parent=55 // pred_check
          %p651 = pneg %p182
        $region62: #{tpu_custom_call.1} parent=55 // pred_check_branch
          %653 = sbr.rel (%p651) target = $region64
        $region63: #{tpu_custom_call.1} parent=55 // pred_region
          %s654 = smul.u32 16, %s23
          %p655 = scmp.lt.s32.totalorder %s654, 47
          %s656 = scalar_select %p655, %s654, 47
          %s657 = smul.addr %s656, 8
          %s658 = scalar_lea.vmem %s6, %s657
        $region64: #{tpu_custom_call.1} parent=55 // pred_fallthru
          _
        // Predicated region
        $region65: #{tpu_custom_call.1} parent=55 // pred_check
          %p659 = pneg %p208
        $region66: #{tpu_custom_call.1} parent=55 // pred_check_branch
          %661 = sbr.rel (%p659) target = $region68
        $region67: #{tpu_custom_call.1} parent=55 // pred_region
          %s662 = smul.u32 16, %s23
          %p663 = scmp.lt.s32.totalorder %s662, 47
          %s664 = scalar_select %p663, %s662, 47
          %s665 = smul.addr %s664, 8
          %s666 = scalar_lea.vmem %s7, %s665
        $region68: #{tpu_custom_call.1} parent=55 // pred_fallthru
          _
      $region56: #{tpu_custom_call.1} parent=5 // pred_fallthru
        _
    $region6: #{tpu_custom_call.1} parent=1 // loop_footer
      %s21 = sadd.s32 1, %s17
    $region7: #{tpu_custom_call.1} parent=1 // loop_footer_branch
      %16 = sbr.rel target = $region3
    $region8: #{tpu_custom_call.1} parent=1 // loop_exit
      _
    %667 = vsyncpa [#allocation3], 1
    %s668 = scalar_lea.sflag [#allocation3], 1
    %669 = vsyncpa %s668, 1

</llo_original>
